<compile_context>
chip_gen: v7x
topology: tpu7x:2x2x1
jax: 0.10.0
libtpu: 0.0.40
codegen_flags: <defaults>
</compile_context>

<pallas_src>
import jax
import jax.numpy as jnp
from jax.experimental import pallas as pl
from jax.experimental.pallas import tpu as pltpu

K_IN = 43   # torch Linear(43, 64) input features
H1 = 64
H2 = 128


def mlp_kernel(x_ref, w1_ref, b1_ref, w2_ref, b2_ref, w3_ref, b3_ref, o_ref):
    cd = w1_ref.dtype  # compute dtype for the MXU matmuls (bf16 by default)

    # hidden1: (tile, 43) @ (43, 64) -> f32 accumulation (MXU pads K=43).
    x = x_ref[...].astype(cd)
    h1 = jnp.dot(x, w1_ref[...], preferred_element_type=jnp.float32)
    h1 = jnp.maximum(h1 + b1_ref[...], 0.0)            # f32 VPU

    # hidden2: (tile, 64) @ (64, 128) -> f32 accumulation.
    h2 = jnp.dot(h1.astype(cd), w2_ref[...], preferred_element_type=jnp.float32)
    h2 = jnp.maximum(h2 + b2_ref[...], 0.0)             # f32 VPU

    # output (N=1) on the MXU, contracting the lane axis of both operands
    # (same trans-B dimension_numbers pattern as flash attention's q @ k^T).
    # w3 is zero-padded to (8, 128) with row 0 holding the real weights, so
    # the result (8, tile) is an aligned MXU shape and row 0 is the answer,
    # already lane-dense for an unmasked (1, tile) store.
    out8 = jax.lax.dot_general(
        w3_ref[...], h2,
        dimension_numbers=(((1,), (1,)), ((), ())),
        preferred_element_type=jnp.float32)              # (8, tile)
    o_ref[...] = (out8[0:1, :] + b3_ref[0, 0]).astype(o_ref.dtype)  # (1, tile)


def _round_up(n, m):
    return ((n + m - 1) // m) * m


def _choose_tile(batch, tb):
    """Pick the batch-tile size.

    Multi-tile case: tile is a multiple of 128 rows (lane-dense unmasked
    output stores, and satisfies f32/bf16 sublane packing), capped so both
    v7x TensorCores get at least one tile.  Small batches use one
    full-batch tile (block == full array dim is always legal)."""
    if batch < 256:
        return batch, 1
    tb = max(128, _round_up(tb, 128))
    tb = min(tb, _round_up((batch + 1) // 2, 128))   # ensure grid >= 2
    num_tiles = (batch + tb - 1) // tb
    return tb, num_tiles


def init_params(key):
    """Deterministic init mimicking torch.nn.Linear (uniform +-1/sqrt(fan_in)).
    Weights stored as (in, out) (pre-transposed vs. PyTorch's (out, in))."""
    def linear(k, fan_in, fan_out):
        kw, kb = jax.random.split(k)
        bound = 1.0 / jnp.sqrt(fan_in)
        w = jax.random.uniform(kw, (fan_in, fan_out), jnp.float32, -bound, bound)
        b = jax.random.uniform(kb, (fan_out,), jnp.float32, -bound, bound)
        return w, b

    k1, k2, k3 = jax.random.split(key, 3)
    w1, b1 = linear(k1, K_IN, H1)
    w2, b2 = linear(k2, H1, H2)
    w3, b3 = linear(k3, H2, 1)
    return (w1, b1, w2, b2, w3, b3)


def prepare_params(params, compute_dtype=jnp.bfloat16):
    """Kernel-layout params: matmul weights in compute_dtype (bf16 default),
    biases f32, w3 as an (8, 128) f32 block (row 0 = weights, rest zero) for
    the lane-dense MXU layer-3, b3 as a (1, 1) SMEM scalar."""
    w1, b1, w2, b2, w3, b3 = params
    w3_pad = jnp.zeros((8, H2), jnp.float32).at[0, :].set(
        w3.reshape(H2).astype(jnp.float32))
    return (
        w1.astype(compute_dtype),                     # (43, 64)
        b1.reshape(1, H1).astype(jnp.float32),
        w2.astype(compute_dtype),                     # (64, 128)
        b2.reshape(1, H2).astype(jnp.float32),
        w3_pad,                                       # (8, 128) f32
        b3.reshape(1, 1).astype(jnp.float32),         # SMEM scalar
    )


def net_forward(x, kernel_params, *, tb=2048):
    """x: (B, 43). Returns (B, 1) f32.  For the full HBM-traffic win pass x
    already cast to bf16; f32 x is also accepted and cast per tile in-kernel."""
    w1, b1, w2, b2, w3_pad, b3 = kernel_params
    B, K = x.shape
    assert K == K_IN, f"expected {K_IN} input features, got {K}"

    tile, num_tiles = _choose_tile(B, tb)
    grid = (num_tiles,)

    def resident(shape):
        # Same block every grid step -> stays VMEM-resident, DMA'd once.
        return pl.BlockSpec(shape, lambda i: (0, 0))

    out = pl.pallas_call(
        mlp_kernel,
        # Lane-dense output row; padded tail entries (partial last tile) are
        # garbage and get sliced off below.
        out_shape=jax.ShapeDtypeStruct((1, num_tiles * tile), jnp.float32),
        grid=grid,
        in_specs=[
            pl.BlockSpec((tile, K_IN), lambda i: (i, 0)),        # x (streamed)
            resident((K_IN, H1)),                                # w1
            resident((1, H1)),                                   # b1
            resident((H1, H2)),                                  # w2
            resident((1, H2)),                                   # b2
            resident((8, H2)),                                   # w3 (padded)
            pl.BlockSpec(memory_space=pltpu.MemorySpace.SMEM),   # b3 scalar
        ],
        out_specs=pl.BlockSpec((1, tile), lambda i: (0, i)),
        compiler_params=pltpu.CompilerParams(
            dimension_semantics=("parallel",),   # shard tiles over v7x's 2 TCs
            vmem_limit_bytes=32 * 1024 * 1024,   # usage is ~1-2 MiB at tb=2048
        ),
    )(x, w1, b1, w2, b2, w3_pad, b3)
    # TODO(synk): no dropout/training-mode behaviour in the module; only the
    # inference forward pass is implemented.
    return out.reshape(-1)[:B].reshape(B, 1)


def reference_forward(x, params):
    w1, b1, w2, b2, w3, b3 = params
    h1 = jnp.maximum(x @ w1 + b1, 0.0)
    h2 = jnp.maximum(h1 @ w2 + b2, 0.0)
    return h2 @ w3 + b3


if __name__ == "__main__":
    key = jax.random.PRNGKey(0)
    kx, kp = jax.random.split(key)
    params = init_params(kp)

    # Small batch (single full-batch tile).
    B = 8
    x = jax.random.normal(kx, (B, K_IN), jnp.float32)
    ref = reference_forward(x, params)

    # f32 compute path (tight check against the reference).
    kp_f32 = prepare_params(params, jnp.float32)
    out = jax.block_until_ready(net_forward(x, kp_f32))
    assert out.shape == (B, 1)
    assert jnp.allclose(out, ref, atol=1e-5, rtol=1e-5)

    # Default bf16 matmul path (looser tolerance; activations rounded to bf16).
    kp_bf16 = prepare_params(params)
    out_bf16 = jax.block_until_ready(net_forward(x, kp_bf16))
    assert out_bf16.shape == (B, 1)
    assert jnp.allclose(out_bf16, ref, atol=1e-1, rtol=1e-1)

    # Larger batch: multi-tile grid, partial last tile, VMEM-resident weights,
    # no wrapper-side padding or copies of x.
    B2 = 1000
    x2 = jax.random.normal(kx, (B2, K_IN), jnp.float32)
    ref2 = reference_forward(x2, params)
    out2 = jax.block_until_ready(net_forward(x2, kp_f32))
    assert out2.shape == (B2, 1)
    assert jnp.allclose(out2, ref2, atol=1e-4, rtol=1e-4)
    out2_bf16 = jax.block_until_ready(net_forward(x2, kp_bf16))
    assert out2_bf16.shape == (B2, 1)
    assert jnp.allclose(out2_bf16, ref2, atol=1e-1, rtol=1e-1)

    print("KERNEL_OK")
</pallas_src>

<mosaic_0001>
module attributes {stable_mosaic.version = 11 : i64} {
  func.func @mlp_kernel(%arg0: i32, %arg1: memref<8x43xf32, #tpu.memory_space<vmem>>, %arg2: memref<43x64xf32, #tpu.memory_space<vmem>>, %arg3: memref<1x64xf32, #tpu.memory_space<vmem>>, %arg4: memref<64x128xf32, #tpu.memory_space<vmem>>, %arg5: memref<1x128xf32, #tpu.memory_space<vmem>>, %arg6: memref<8x128xf32, #tpu.memory_space<vmem>>, %arg7: memref<1x1xf32, #tpu.memory_space<smem>>, %arg8: memref<1x8xf32, #tpu.memory_space<vmem>>) attributes {dimension_semantics = [#tpu.dimension_semantics<parallel>], iteration_bounds = array<i64: 1>, scalar_prefetch = 0 : i64, scratch_operands = 0 : i64, tpu.core_type = #tpu.core_type<tc>, window_params = [{transform_indices = @transform_0, window_bounds = array<i64: 8, 43>}, {pipeline_mode = #tpu.pipeline_mode<synchronous>, transform_indices = @transform_1, window_bounds = array<i64: 43, 64>}, {pipeline_mode = #tpu.pipeline_mode<synchronous>, transform_indices = @transform_2, window_bounds = array<i64: 1, 64>}, {pipeline_mode = #tpu.pipeline_mode<synchronous>, transform_indices = @transform_3, window_bounds = array<i64: 64, 128>}, {pipeline_mode = #tpu.pipeline_mode<synchronous>, transform_indices = @transform_4, window_bounds = array<i64: 1, 128>}, {pipeline_mode = #tpu.pipeline_mode<synchronous>, transform_indices = @transform_5, window_bounds = array<i64: 8, 128>}, {transform_indices = @transform_6, window_bounds = array<i64: 1, 1>}, {transform_indices = @transform_7, window_bounds = array<i64: 1, 8>}]} {
    %c0 = arith.constant 0 : index
    %c0_0 = arith.constant 0 : index
    %0 = vector.load %arg1[%c0, %c0_0] : memref<8x43xf32, #tpu.memory_space<vmem>>, vector<8x43xf32>
    %c0_1 = arith.constant 0 : index
    %c0_2 = arith.constant 0 : index
    %1 = vector.load %arg2[%c0_1, %c0_2] : memref<43x64xf32, #tpu.memory_space<vmem>>, vector<43x64xf32>
    %cst = arith.constant dense<0.000000e+00> : vector<8x64xf32>
    %2 = tpu.matmul %0, %1, %cst {dimension_numbers = #tpu.dot_dimension_numbers<[1], [0], [0], [1], [0, 0, 1, 1], [], []>} : vector<8x43xf32>, vector<43x64xf32>, vector<8x64xf32> -> vector<8x64xf32>
    %c0_3 = arith.constant 0 : index
    %c0_4 = arith.constant 0 : index
    %3 = vector.load %arg3[%c0_3, %c0_4] : memref<1x64xf32, #tpu.memory_space<vmem>>, vector<1x64xf32>
    %4 = vector.broadcast %3 : vector<1x64xf32> to vector<8x64xf32>
    %5 = arith.addf %2, %4 : vector<8x64xf32>
    %cst_5 = arith.constant 0.000000e+00 : f32
    %6 = vector.broadcast %cst_5 : f32 to vector<8x64xf32>
    %7 = arith.maximumf %5, %6 : vector<8x64xf32>
    %c0_6 = arith.constant 0 : index
    %c0_7 = arith.constant 0 : index
    %8 = vector.load %arg4[%c0_6, %c0_7] : memref<64x128xf32, #tpu.memory_space<vmem>>, vector<64x128xf32>
    %cst_8 = arith.constant dense<0.000000e+00> : vector<8x128xf32>
    %9 = tpu.matmul %7, %8, %cst_8 {dimension_numbers = #tpu.dot_dimension_numbers<[1], [0], [0], [1], [0, 0, 1, 1], [], []>} : vector<8x64xf32>, vector<64x128xf32>, vector<8x128xf32> -> vector<8x128xf32>
    %c0_9 = arith.constant 0 : index
    %c0_10 = arith.constant 0 : index
    %10 = vector.load %arg5[%c0_9, %c0_10] : memref<1x128xf32, #tpu.memory_space<vmem>>, vector<1x128xf32>
    %11 = vector.broadcast %10 : vector<1x128xf32> to vector<8x128xf32>
    %12 = arith.addf %9, %11 : vector<8x128xf32>
    %cst_11 = arith.constant 0.000000e+00 : f32
    %13 = vector.broadcast %cst_11 : f32 to vector<8x128xf32>
    %14 = arith.maximumf %12, %13 : vector<8x128xf32>
    %c0_12 = arith.constant 0 : index
    %c0_13 = arith.constant 0 : index
    %15 = vector.load %arg6[%c0_12, %c0_13] : memref<8x128xf32, #tpu.memory_space<vmem>>, vector<8x128xf32>
    %cst_14 = arith.constant dense<0.000000e+00> : vector<8x8xf32>
    %16 = tpu.matmul %15, %14, %cst_14 {dimension_numbers = #tpu.dot_dimension_numbers<[1], [1], [0], [0], [0, 0, 1, 0], [], []>} : vector<8x128xf32>, vector<8x128xf32>, vector<8x8xf32> -> vector<8x8xf32>
    %17 = vector.extract_strided_slice %16 {offsets = [0, 0], sizes = [1, 8], strides = [1, 1]} : vector<8x8xf32> to vector<1x8xf32>
    %c0_15 = arith.constant 0 : index
    %c0_16 = arith.constant 0 : index
    %18 = memref.load %arg7[%c0_15, %c0_16] : memref<1x1xf32, #tpu.memory_space<smem>>
    %19 = vector.broadcast %18 : f32 to vector<1x8xf32>
    %20 = arith.addf %17, %19 : vector<1x8xf32>
    %c0_17 = arith.constant 0 : index
    %c0_18 = arith.constant 0 : index
    %21 = vector.load %arg8[%c0_17, %c0_18] : memref<1x8xf32, #tpu.memory_space<vmem>>, vector<1x8xf32>
    tpu.vector_store %arg8[%c0_17, %c0_18], %20 {strides = array<i32>} : memref<1x8xf32, #tpu.memory_space<vmem>>, vector<1x8xf32>,
    return
  }
  func.func @transform_0(%arg0: i32) -> (i32, i32) {
    %c0_i32 = arith.constant 0 : i32
    %c0_i32_0 = arith.constant 0 : i32
    return %arg0, %c0_i32 : i32, i32
  }
  func.func @transform_1(%arg0: i32) -> (i32, i32) {
    %c0_i32 = arith.constant 0 : i32
    %c0_i32_0 = arith.constant 0 : i32
    %c0_i32_1 = arith.constant 0 : i32
    return %c0_i32, %c0_i32_0 : i32, i32
  }
  func.func @transform_2(%arg0: i32) -> (i32, i32) {
    %c0_i32 = arith.constant 0 : i32
    %c0_i32_0 = arith.constant 0 : i32
    %c0_i32_1 = arith.constant 0 : i32
    return %c0_i32, %c0_i32_0 : i32, i32
  }
  func.func @transform_3(%arg0: i32) -> (i32, i32) {
    %c0_i32 = arith.constant 0 : i32
    %c0_i32_0 = arith.constant 0 : i32
    %c0_i32_1 = arith.constant 0 : i32
    return %c0_i32, %c0_i32_0 : i32, i32
  }
  func.func @transform_4(%arg0: i32) -> (i32, i32) {
    %c0_i32 = arith.constant 0 : i32
    %c0_i32_0 = arith.constant 0 : i32
    %c0_i32_1 = arith.constant 0 : i32
    return %c0_i32, %c0_i32_0 : i32, i32
  }
  func.func @transform_5(%arg0: i32) -> (i32, i32) {
    %c0_i32 = arith.constant 0 : i32
    %c0_i32_0 = arith.constant 0 : i32
    %c0_i32_1 = arith.constant 0 : i32
    return %c0_i32, %c0_i32_0 : i32, i32
  }
  func.func @transform_6(%arg0: i32) -> (i32, i32) {
    %c0_i32 = arith.constant 0 : i32
    %c0_i32_0 = arith.constant 0 : i32
    %c0_i32_1 = arith.constant 0 : i32
    return %c0_i32, %c0_i32_0 : i32, i32
  }
  func.func @transform_7(%arg0: i32) -> (i32, i32) {
    %c0_i32 = arith.constant 0 : i32
    %c0_i32_0 = arith.constant 0 : i32
    return %c0_i32, %arg0 : i32, i32
  }
}

</mosaic_0001>

<llo_original>
// kernel: tpu_custom_call.1
$region0: #{tpu_custom_call.1}
  #allocation0 [shape = 'u32[]', space=smem, size = 0x4, offset = 0x4, fixed_abs, tag = 'smem constant byte address 0x4 - core index']
  #allocation1 [shape = 'u32[144,128]{1,0:T(1,128)}', space=vmem, size = 0x12000, scoped, tag = 'internal scratch']
  #allocation2 [shape = 'f32[1,1]{1,0:T(1,128)S(6)}', space=smem, size = 0x200, scoped, tag = 'scoped memory for tpu_custom_call.1']
  %s0 = inlined_call_operand.hbm [shape: f32[8,43], index: 0, kind: input, shape index: {}]
  %s1 = inlined_call_operand.hbm [shape: f32[43,64], index: 1, kind: input, shape index: {}]
  %s2 = inlined_call_operand.vmem [shape: f32[1,64], index: 2, kind: input, shape index: {}]
  %s3 = inlined_call_operand.hbm [shape: f32[64,128], index: 3, kind: input, shape index: {}]
  %s4 = inlined_call_operand.vmem [shape: f32[1,128], index: 4, kind: input, shape index: {}]
  %s5 = inlined_call_operand.vmem [shape: f32[8,128], index: 5, kind: input, shape index: {}]
  %s6 = inlined_call_operand.<no memory space> [shape: f32[1,1], index: 6, kind: input, shape index: {}]
  %s7 = inlined_call_operand.hbm [shape: f32[1,8], index: 7, kind: output, shape index: {}]
  %s8 = sld [smem:[#allocation0]]
  $region50: #{tpu_custom_call.1} parent=0
    _
  %s10 = ssub.s32 1, %s8
  %s11 = scalar_select 0, %s10, %s8
  %12 = sst [smem:[#allocation2]] %s6
  $region1: #{tpu_custom_call.1} parent=0
    #allocation3 [shape = 'u8[4096]{0}', space=vmem, size = 0x1000, scoped, tag = 'input window, operand 0, single buffered']
    #allocation4 [shape = 's32[1]{0}', space=sflag, size = 0x4, scoped, tag = 'scoped memory for tpu_custom_call.1']
    #allocation5 [shape = 's32[1]{0}', space=sflag, size = 0x4, scoped, tag = 'scoped memory for tpu_custom_call.1']
    #allocation6 [shape = 'u8[24576]{0}', space=vmem, size = 0x6000, scoped, tag = 'input window, operand 1, single buffered']
    #allocation7 [shape = 's32[1]{0}', space=sflag, size = 0x4, scoped, tag = 'scoped memory for tpu_custom_call.1']
    #allocation8 [shape = 'u8[32768]{0}', space=vmem, size = 0x8000, scoped, tag = 'input window, operand 3, single buffered']
    #allocation9 [shape = 'u8[512]{0}', space=vmem, size = 0x400, scoped, tag = 'output window, operand 0, single buffered']
    %13 = vsyncpa [#allocation4], 0
    %14 = vsyncpa [#allocation7], 0
    %15 = vsyncpa [#allocation5], 0
    // Predicated region
    $region2: #{tpu_custom_call.1} parent=1 // pred_check
      _
    $region3: #{tpu_custom_call.1} parent=1 // pred_check_branch
      %17 = sbr.rel (0) target = $region5
    $region4: #{tpu_custom_call.1} parent=1 // pred_region
      %s19 = ssub.s32 128, 128
      %20 = vsyncadd [#allocation4], %s19
      %s22 = sshll.u32 [#allocation3], 4
      %s23 = int_to_ptr.vmem [resolvable:$true] %s22
      %25 = dma.hbm_to_vmem [thread:$0]  %s0, 128, %s23, [#allocation4]
    $region5: #{tpu_custom_call.1} parent=1 // pred_fallthru
      _
    // Predicated region
    $region6: #{tpu_custom_call.1} parent=1 // pred_check
      _
    $region7: #{tpu_custom_call.1} parent=1 // pred_check_branch
      %27 = sbr.rel (0) target = $region9
    $region8: #{tpu_custom_call.1} parent=1 // pred_region
      %s29 = ssub.s32 768, 768
      %30 = vsyncadd [#allocation7], %s29
      %s31 = sshll.u32 [#allocation6], 4
      %s32 = int_to_ptr.vmem [resolvable:$true] %s31
      %37 = dma.hbm_to_vmem [thread:$0]  %s1, 768, %s32, [#allocation7], 128, 128, 8
    $region9: #{tpu_custom_call.1} parent=1 // pred_fallthru
      _
    // Predicated region
    $region10: #{tpu_custom_call.1} parent=1 // pred_check
      _
    $region11: #{tpu_custom_call.1} parent=1 // pred_check_branch
      %39 = sbr.rel (0) target = $region13
    $region12: #{tpu_custom_call.1} parent=1 // pred_region
      _
    $region13: #{tpu_custom_call.1} parent=1 // pred_fallthru
      _
    // Predicated region
    $region14: #{tpu_custom_call.1} parent=1 // pred_check
      _
    $region15: #{tpu_custom_call.1} parent=1 // pred_check_branch
      %41 = sbr.rel (0) target = $region17
    $region16: #{tpu_custom_call.1} parent=1 // pred_region
      %s43 = ssub.s32 1024, 1024
      %44 = vsyncadd [#allocation7], %s43
      %s45 = sshll.u32 [#allocation8], 4
      %s46 = int_to_ptr.vmem [resolvable:$true] %s45
      %51 = dma.hbm_to_vmem [thread:$0]  %s3, 1024, %s46, [#allocation7], 128, 128, 8
    $region17: #{tpu_custom_call.1} parent=1 // pred_fallthru
      _
    // Predicated region
    $region18: #{tpu_custom_call.1} parent=1 // pred_check
      _
    $region19: #{tpu_custom_call.1} parent=1 // pred_check_branch
      %53 = sbr.rel (0) target = $region21
    $region20: #{tpu_custom_call.1} parent=1 // pred_region
      _
    $region21: #{tpu_custom_call.1} parent=1 // pred_fallthru
      _
    // Predicated region
    $region22: #{tpu_custom_call.1} parent=1 // pred_check
      _
    $region23: #{tpu_custom_call.1} parent=1 // pred_check_branch
      %55 = sbr.rel (0) target = $region25
    $region24: #{tpu_custom_call.1} parent=1 // pred_region
      _
    $region25: #{tpu_custom_call.1} parent=1 // pred_fallthru
      _
    // Predicated region
    $region26: #{tpu_custom_call.1} parent=1 // pred_check
      _
    $region27: #{tpu_custom_call.1} parent=1 // pred_check_branch
      %57 = sbr.rel (0) target = $region29
    $region28: #{tpu_custom_call.1} parent=1 // pred_region
      _
    $region29: #{tpu_custom_call.1} parent=1 // pred_fallthru
      _
    // Predicated region
    $region30: #{tpu_custom_call.1} parent=1 // pred_check
      _
    $region31: #{tpu_custom_call.1} parent=1 // pred_check_branch
      %59 = sbr.rel (0) target = $region33
    $region32: #{tpu_custom_call.1} parent=1 // pred_region
      %60 = dma.done [#allocation4], 128
    $region33: #{tpu_custom_call.1} parent=1 // pred_fallthru
      _
    // Predicated region
    $region34: #{tpu_custom_call.1} parent=1 // pred_check
      _
    $region35: #{tpu_custom_call.1} parent=1 // pred_check_branch
      %62 = sbr.rel (0) target = $region37
    $region36: #{tpu_custom_call.1} parent=1 // pred_region
      %63 = dma.done [#allocation7], 768
    $region37: #{tpu_custom_call.1} parent=1 // pred_fallthru
      _
    // Predicated region
    $region38: #{tpu_custom_call.1} parent=1 // pred_check
      _
    $region39: #{tpu_custom_call.1} parent=1 // pred_check_branch
      %65 = sbr.rel (0) target = $region41
    $region40: #{tpu_custom_call.1} parent=1 // pred_region
      %66 = dma.done [#allocation7], 1024
    $region41: #{tpu_custom_call.1} parent=1 // pred_fallthru
      _
    %v67 = vld [vmem:[#allocation3] sm:$0xff]
    %v68 = vld [vmem:[#allocation6] sm:$0xff]
    %v69 = vld [vmem:[#allocation6 + $0x8] sm:$0xff]
    %v70 = vld [vmem:[#allocation6 + $0x10] sm:$0xff]
    %v71 = vld [vmem:[#allocation6 + $0x18] sm:$0xff]
    %v72 = vld [vmem:[#allocation6 + $0x20] sm:$0xff]
    %v73 = vld [vmem:[#allocation6 + $0x28] sm:$0x7]
    %v74 = vld [vmem:[%s2] sm:$0x1]
    %v76 = vlaneseq
    %v77 = vshrl.u32 %v76, 7
    %v78 = vsub.s32 0, %v77
    %v79 = vrot.slane %v74, %v78
    %vm81 = vcmask 351232
    %v83 = vsel %vm81, %v67, 0
    %vm85 = vcmask 1042432
    %v87 = vsel %vm85, %v73, 0
    %89 = vmatprep.subr.mxu0 0.0
    %90 = vmatpush1.msra.mxu0 %v68
    %91 = vmatprep.subr.mxu0 0.0
    %92 = vmatpush1.msra.mxu0 %v69
    %93 = vmatprep.subr.mxu0 0.0
    %94 = vmatpush1.msra.mxu0 %v70
    %95 = vmatprep.subr.mxu0 0.0
    %96 = vmatpush1.msra.mxu0 %v71
    %97 = vmatprep.subr.mxu0 0.0
    %98 = vmatpush1.msra.mxu0 %v72
    %99 = vmatprep.subr.mxu0 0.0
    %100 = vmatpush1.msra.mxu0 %v87
    %101 = vmatprep.subr.mxu0 0.0
    %102 = vmatpush1.msra.mxu0 0.0
    %103 = vmatprep.subr.mxu0 0.0
    %104 = vmatpush1.msra.mxu0 0.0
    %105 = vmatprep.subr.mxu0 0.0
    %106 = vmatpush1.msra.mxu0 0.0
    %107 = vmatprep.subr.mxu0 0.0
    %108 = vmatpush1.msra.mxu0 0.0
    %109 = vmatprep.subr.mxu0 0.0
    %110 = vmatpush1.msra.mxu0 0.0
    %111 = vmatprep.subr.mxu0 0.0
    %112 = vmatpush1.msra.mxu0 0.0
    %113 = vmatprep.subr.mxu0 0.0
    %114 = vmatpush1.msra.mxu0 0.0
    %115 = vmatprep.subr.mxu0 0.0
    %116 = vmatpush1.msra.mxu0 0.0
    %117 = vmatprep.subr.mxu0 0.0
    %118 = vmatpush1.msra.mxu0 0.0
    %119 = vmatprep.subr.mxu0 0.0
    %120 = vmatpush1.msra.mxu0 0.0
    %121 = vmatprep.subr.mxu0 0.0
    %122 = vmatpush1.msra.mxu0 0.0
    %123 = vmatprep.subr.mxu0 0.0
    %124 = vmatpush1.msra.mxu0 0.0
    %125 = vmatprep.subr.mxu0 0.0
    %126 = vmatpush1.msra.mxu0 0.0
    %127 = vmatprep.subr.mxu0 0.0
    %128 = vmatpush1.msra.mxu0 0.0
    %129 = vmatprep.subr.mxu0 0.0
    %130 = vmatpush1.msra.mxu0 0.0
    %131 = vmatprep.subr.mxu0 0.0
    %132 = vmatpush1.msra.mxu0 0.0
    %133 = vmatprep.subr.mxu0 0.0
    %134 = vmatpush1.msra.mxu0 0.0
    %135 = vmatprep.subr.mxu0 0.0
    %136 = vmatpush1.msra.mxu0 0.0
    %137 = vmatprep.subr.mxu0 0.0
    %138 = vmatpush1.msra.mxu0 0.0
    %139 = vmatprep.subr.mxu0 0.0
    %140 = vmatpush1.msra.mxu0 0.0
    %141 = vmatprep.subr.mxu0 0.0
    %142 = vmatpush1.msra.mxu0 0.0
    %143 = vmatprep.subr.mxu0 0.0
    %144 = vmatpush1.msra.mxu0 0.0
    %145 = vmatprep.subr.mxu0 0.0
    %146 = vmatpush1.msra.mxu0 0.0
    %147 = vmatprep.subr.mxu0 0.0
    %148 = vmatpush1.msra.mxu0 0.0
    %149 = vmatprep.subr.mxu0 0.0
    %150 = vmatpush1.msra.mxu0 0.0
    %151 = vmatprep.subr.mxu0 0.0
    %152 = vmatpush1.msra.mxu0 0.0
    %153 = vmatprep.mubr.f32.mxu0 0.0
    %154 = vmatmul.mubr.f32.gmra.mrb[0].mxu0 %v83
    %v155 = vpop.f32.mrb[0].mxu0
    %v156 = vadd.f32 %v79, %v155
    %v157 = vpop.f32.mrb[0].mxu0
    %158 = vdwg.mxu0
    %v159 = vmax.f32 %v156, 0.0
    %v160 = vld [vmem:[#allocation8] sm:$0xff]
    %v161 = vld [vmem:[#allocation8 + $0x8] sm:$0xff]
    %v162 = vld [vmem:[#allocation8 + $0x10] sm:$0xff]
    %v163 = vld [vmem:[#allocation8 + $0x18] sm:$0xff]
    %v164 = vld [vmem:[#allocation8 + $0x20] sm:$0xff]
    %v165 = vld [vmem:[#allocation8 + $0x28] sm:$0xff]
    %v166 = vld [vmem:[#allocation8 + $0x30] sm:$0xff]
    %v167 = vld [vmem:[#allocation8 + $0x38] sm:$0xff]
    %v168 = vld [vmem:[%s4] sm:$0x1]
    %v170 = vlaneseq
    %v171 = vshrl.u32 %v170, 7
    %v172 = vsub.s32 0, %v171
    %v173 = vrot.slane %v168, %v172
    %vm175 = vcmask 523264
    %v177 = vsel %vm175, %v159, 0
    %179 = vmatprep.subr.mxu0 0.0
    %180 = vmatpush1.msra.mxu0 %v160
    %181 = vmatprep.subr.mxu0 0.0
    %182 = vmatpush1.msra.mxu0 %v161
    %183 = vmatprep.subr.mxu0 0.0
    %184 = vmatpush1.msra.mxu0 %v162
    %185 = vmatprep.subr.mxu0 0.0
    %186 = vmatpush1.msra.mxu0 %v163
    %187 = vmatprep.subr.mxu0 0.0
    %188 = vmatpush1.msra.mxu0 %v164
    %189 = vmatprep.subr.mxu0 0.0
    %190 = vmatpush1.msra.mxu0 %v165
    %191 = vmatprep.subr.mxu0 0.0
    %192 = vmatpush1.msra.mxu0 %v166
    %193 = vmatprep.subr.mxu0 0.0
    %194 = vmatpush1.msra.mxu0 %v167
    %195 = vmatprep.subr.mxu0 0.0
    %196 = vmatpush1.msra.mxu0 0.0
    %197 = vmatprep.subr.mxu0 0.0
    %198 = vmatpush1.msra.mxu0 0.0
    %199 = vmatprep.subr.mxu0 0.0
    %200 = vmatpush1.msra.mxu0 0.0
    %201 = vmatprep.subr.mxu0 0.0
    %202 = vmatpush1.msra.mxu0 0.0
    %203 = vmatprep.subr.mxu0 0.0
    %204 = vmatpush1.msra.mxu0 0.0
    %205 = vmatprep.subr.mxu0 0.0
    %206 = vmatpush1.msra.mxu0 0.0
    %207 = vmatprep.subr.mxu0 0.0
    %208 = vmatpush1.msra.mxu0 0.0
    %209 = vmatprep.subr.mxu0 0.0
    %210 = vmatpush1.msra.mxu0 0.0
    %211 = vmatprep.subr.mxu0 0.0
    %212 = vmatpush1.msra.mxu0 0.0
    %213 = vmatprep.subr.mxu0 0.0
    %214 = vmatpush1.msra.mxu0 0.0
    %215 = vmatprep.subr.mxu0 0.0
    %216 = vmatpush1.msra.mxu0 0.0
    %217 = vmatprep.subr.mxu0 0.0
    %218 = vmatpush1.msra.mxu0 0.0
    %219 = vmatprep.subr.mxu0 0.0
    %220 = vmatpush1.msra.mxu0 0.0
    %221 = vmatprep.subr.mxu0 0.0
    %222 = vmatpush1.msra.mxu0 0.0
    %223 = vmatprep.subr.mxu0 0.0
    %224 = vmatpush1.msra.mxu0 0.0
    %225 = vmatprep.subr.mxu0 0.0
    %226 = vmatpush1.msra.mxu0 0.0
    %227 = vmatprep.subr.mxu0 0.0
    %228 = vmatpush1.msra.mxu0 0.0
    %229 = vmatprep.subr.mxu0 0.0
    %230 = vmatpush1.msra.mxu0 0.0
    %231 = vmatprep.subr.mxu0 0.0
    %232 = vmatpush1.msra.mxu0 0.0
    %233 = vmatprep.subr.mxu0 0.0
    %234 = vmatpush1.msra.mxu0 0.0
    %235 = vmatprep.subr.mxu0 0.0
    %236 = vmatpush1.msra.mxu0 0.0
    %237 = vmatprep.subr.mxu0 0.0
    %238 = vmatpush1.msra.mxu0 0.0
    %239 = vmatprep.subr.mxu0 0.0
    %240 = vmatpush1.msra.mxu0 0.0
    %241 = vmatprep.subr.mxu0 0.0
    %242 = vmatpush1.msra.mxu0 0.0
    %243 = vmatprep.mubr.f32.mxu0 0.0
    %244 = vmatmul.mubr.f32.gmra.mrb[0].mxu0 %v177
    %v245 = vpop.f32.mrb[0].mxu0
    %v246 = vadd.f32 %v173, %v245
    %v247 = vpop.f32.mrb[0].mxu0
    %248 = vdwg.mxu0
    %v249 = vmax.f32 %v246, 0.0
    %v250 = vld [vmem:[%s5] sm:$0xff]
    %251 = vmatprep.subr.mxu0 0.0
    %252 = vmatpush1.xpose.msra.mxu0 %v249
    %253 = vmatprep.subr.mxu0 0.0
    %254 = vmatpush1.xpose.msra.mxu0 0.0
    %255 = vmatprep.subr.mxu0 0.0
    %256 = vmatpush1.xpose.msra.mxu0 0.0
    %257 = vmatprep.subr.mxu0 0.0
    %258 = vmatpush1.xpose.msra.mxu0 0.0
    %259 = vmatprep.subr.mxu0 0.0
    %260 = vmatpush1.xpose.msra.mxu0 0.0
    %261 = vmatprep.subr.mxu0 0.0
    %262 = vmatpush1.xpose.msra.mxu0 0.0
    %263 = vmatprep.subr.mxu0 0.0
    %264 = vmatpush1.xpose.msra.mxu0 0.0
    %265 = vmatprep.subr.mxu0 0.0
    %266 = vmatpush1.xpose.msra.mxu0 0.0
    %267 = vmatprep.subr.mxu0 0.0
    %268 = vmatpush1.xpose.msra.mxu0 0.0
    %269 = vmatprep.subr.mxu0 0.0
    %270 = vmatpush1.xpose.msra.mxu0 0.0
    %271 = vmatprep.subr.mxu0 0.0
    %272 = vmatpush1.xpose.msra.mxu0 0.0
    %273 = vmatprep.subr.mxu0 0.0
    %274 = vmatpush1.xpose.msra.mxu0 0.0
    %275 = vmatprep.subr.mxu0 0.0
    %276 = vmatpush1.xpose.msra.mxu0 0.0
    %277 = vmatprep.subr.mxu0 0.0
    %278 = vmatpush1.xpose.msra.mxu0 0.0
    %279 = vmatprep.subr.mxu0 0.0
    %280 = vmatpush1.xpose.msra.mxu0 0.0
    %281 = vmatprep.subr.mxu0 0.0
    %282 = vmatpush1.xpose.msra.mxu0 0.0
    %283 = vmatprep.subr.mxu0 0.0
    %284 = vmatpush1.xpose.msra.mxu0 0.0
    %285 = vmatprep.subr.mxu0 0.0
    %286 = vmatpush1.xpose.msra.mxu0 0.0
    %287 = vmatprep.subr.mxu0 0.0
    %288 = vmatpush1.xpose.msra.mxu0 0.0
    %289 = vmatprep.subr.mxu0 0.0
    %290 = vmatpush1.xpose.msra.mxu0 0.0
    %291 = vmatprep.subr.mxu0 0.0
    %292 = vmatpush1.xpose.msra.mxu0 0.0
    %293 = vmatprep.subr.mxu0 0.0
    %294 = vmatpush1.xpose.msra.mxu0 0.0
    %295 = vmatprep.subr.mxu0 0.0
    %296 = vmatpush1.xpose.msra.mxu0 0.0
    %297 = vmatprep.subr.mxu0 0.0
    %298 = vmatpush1.xpose.msra.mxu0 0.0
    %299 = vmatprep.subr.mxu0 0.0
    %300 = vmatpush1.xpose.msra.mxu0 0.0
    %301 = vmatprep.subr.mxu0 0.0
    %302 = vmatpush1.xpose.msra.mxu0 0.0
    %303 = vmatprep.subr.mxu0 0.0
    %304 = vmatpush1.xpose.msra.mxu0 0.0
    %305 = vmatprep.subr.mxu0 0.0
    %306 = vmatpush1.xpose.msra.mxu0 0.0
    %307 = vmatprep.subr.mxu0 0.0
    %308 = vmatpush1.xpose.msra.mxu0 0.0
    %309 = vmatprep.subr.mxu0 0.0
    %310 = vmatpush1.xpose.msra.mxu0 0.0
    %311 = vmatprep.subr.mxu0 0.0
    %312 = vmatpush1.xpose.msra.mxu0 0.0
    %313 = vmatprep.subr.mxu0 0.0
    %314 = vmatpush1.xpose.msra.mxu0 0.0
    %315 = vmatprep.mubr.f32.mxu0 0.0
    %316 = vmatmul.mubr.f32.gmra.mrb[0].mxu0 %v250
    %v317 = vpop.f32.mrb[0].mxu0
    %v318 = vadd.f32 0.0, %v317
    %v319 = vpop.f32.mrb[0].mxu0
    %320 = vdwg.mxu0
    %s321 = sld [smem:[#allocation2]]
    %v322 = vstv %s321
    %v323 = vadd.f32 %v318, %v322
    %vm324 = vcmask 57344
    %325 = vst.msk [vmem:[#allocation9] sm:$0x1] %vm324, %v323
    // Predicated region
    $region42: #{tpu_custom_call.1} parent=1 // pred_check
      _
    $region43: #{tpu_custom_call.1} parent=1 // pred_check_branch
      %327 = sbr.rel (0) target = $region45
    $region44: #{tpu_custom_call.1} parent=1 // pred_region
      %s329 = ssub.s32 16, 16
      %330 = vsyncadd [#allocation5], %s329
      %s332 = sshll.u32 [#allocation9], 4
      %s333 = int_to_ptr.vmem [resolvable:$true] %s332
      %335 = dma.vmem_to_hbm [thread:$0]  %s333, 16, %s7, [#allocation5]
    $region45: #{tpu_custom_call.1} parent=1 // pred_fallthru
      _
    // Predicated region
    $region46: #{tpu_custom_call.1} parent=1 // pred_check
      _
    $region47: #{tpu_custom_call.1} parent=1 // pred_check_branch
      %337 = sbr.rel (0) target = $region49
    $region48: #{tpu_custom_call.1} parent=1 // pred_region
      %338 = dma.done [#allocation5], 16
    $region49: #{tpu_custom_call.1} parent=1 // pred_fallthru
      _
    %339 = vsyncpa [#allocation4], 1
    %340 = vsyncpa [#allocation7], 1
    %341 = vsyncpa [#allocation5], 1

</llo_original>
